<compile_context>
chip_gen: v7x
topology: tpu7x:2x2x1
jax: 0.10.0
libtpu: 0.0.40
codegen_flags: <defaults>
</compile_context>

<pallas_src>
import jax
import jax.numpy as jnp
from jax.experimental import pallas as pl
from jax.experimental.pallas import tpu as pltpu


def _round_up(x, m):
    return ((x + m - 1) // m) * m


def encoder_kernel(x_ref, w1_ref, b1_ref, w2_ref, b2_ref, w3_ref, b3_ref, o_ref):
    # Fused relu(relu(x@W1+b1)@W2+b2)@W3+b3 on one (tb, D_in) batch tile.
    # x streams from HBM in f32 and is cast to bf16 on-tile (MXU-native
    # operands, f32 accumulation via preferred_element_type).
    x = x_ref[...].astype(jnp.bfloat16)
    h1 = jnp.dot(x, w1_ref[...], preferred_element_type=jnp.float32) + b1_ref[...]
    h1 = jnp.maximum(h1, 0.0)
    h2 = jnp.dot(h1.astype(jnp.bfloat16), w2_ref[...],
                 preferred_element_type=jnp.float32) + b2_ref[...]
    h2 = jnp.maximum(h2, 0.0)
    h3 = jnp.dot(h2.astype(jnp.bfloat16), w3_ref[...],
                 preferred_element_type=jnp.float32) + b3_ref[...]
    o_ref[...] = h3.astype(o_ref.dtype)          # f32, lane-dense (E padded to 128)


def prepare_params(params):
    """One-time weight conversion to bf16 + lane padding.

    Call once and cache: converting per forward call (especially under jit)
    re-materializes the bf16 copies every step.
    Zero-padding is mathematically neutral: padded W2 cols / b2 give ReLU(0)=0
    which hits zero-padded W3 rows; padded W3 cols / b3 only fill output lanes
    that the wrapper slices away.
    """
    D_in, H1 = params["w1"].shape
    H2 = params["w2"].shape[1]
    E = params["w3"].shape[1]
    H1p = _round_up(H1, 128)
    H2p = _round_up(H2, 128)     # 16 -> 128: lane-dense h2, full-width MXU tiles
    Ep = _round_up(E, 128)       # 2  -> 128: lane-dense output store

    w1 = jnp.pad(params["w1"].astype(jnp.bfloat16), ((0, 0), (0, H1p - H1)))
    b1 = jnp.pad(params["b1"].astype(jnp.float32), ((0, 0), (0, H1p - H1)))
    w2 = jnp.pad(params["w2"].astype(jnp.bfloat16), ((0, H1p - H1), (0, H2p - H2)))
    b2 = jnp.pad(params["b2"].astype(jnp.float32), ((0, 0), (0, H2p - H2)))
    w3 = jnp.pad(params["w3"].astype(jnp.bfloat16), ((0, H2p - H2), (0, Ep - E)))
    b3 = jnp.pad(params["b3"].astype(jnp.float32), ((0, 0), (0, Ep - E)))
    return {"w1": w1, "b1": b1, "w2": w2, "b2": b2, "w3": w3, "b3": b3,
            "dims": (D_in, H1p, H2p, Ep, E)}


def _pick_tb(b8, tb_max=1024):
    """Batch tile: big (amortize ~0.35us/step overhead) but keep >=2 grid steps
    so both v7x TensorCores get work.  b8 is the batch rounded up to 8."""
    if b8 <= 32:
        return b8
    half = _round_up(-(-b8 // 2), 16)          # ceil(b8/2), multiple of 16
    return max(16, min(tb_max, half))


def encoder_forward(x, prepared, *, tb_max=1024):
    """x: [B, input_dim] float32. prepared: output of prepare_params()."""
    B, D_in = x.shape
    D_p, H1p, H2p, Ep, E = prepared["dims"]
    assert D_in == D_p, "x feature dim does not match prepared params"

    # Pad batch only up to a sublane multiple (<=7 rows), never to a full tile.
    B8 = _round_up(B, 8)
    x_in = x if B8 == B else jnp.pad(x, ((0, B8 - B), (0, 0)))

    tb = _pick_tb(B8, tb_max)
    grid = (pl.cdiv(B8, tb),)

    flops = 2 * B8 * (D_in * H1p + H1p * H2p + H2p * Ep)
    bytes_accessed = (B8 * D_in * 4                      # x (f32 read)
                      + prepared["w1"].size * 2 + prepared["w2"].size * 2
                      + prepared["w3"].size * 2
                      + (H1p + H2p + Ep) * 4             # biases
                      + B8 * Ep * 4)                     # output write

    out = pl.pallas_call(
        encoder_kernel,
        out_shape=jax.ShapeDtypeStruct((B8, Ep), jnp.float32),
        grid_spec=pl.GridSpec(
            grid=grid,
            in_specs=[
                pl.BlockSpec((tb, D_in), lambda i: (i, 0)),    # x tile, no K padding
                pl.BlockSpec((D_in, H1p), lambda i: (0, 0)),   # W1 (VMEM-resident)
                pl.BlockSpec((1, H1p), lambda i: (0, 0)),      # b1
                pl.BlockSpec((H1p, H2p), lambda i: (0, 0)),    # W2
                pl.BlockSpec((1, H2p), lambda i: (0, 0)),      # b2
                pl.BlockSpec((H2p, Ep), lambda i: (0, 0)),     # W3
                pl.BlockSpec((1, Ep), lambda i: (0, 0)),       # b3
            ],
            out_specs=pl.BlockSpec((tb, Ep), lambda i: (i, 0)),
        ),
        compiler_params=pltpu.CompilerParams(
            dimension_semantics=("parallel",),   # batch axis -> both TCs on v7x
        ),
        cost_estimate=pl.CostEstimate(
            flops=flops, transcendentals=0, bytes_accessed=bytes_accessed),
    )(x_in, prepared["w1"], prepared["b1"], prepared["w2"], prepared["b2"],
      prepared["w3"], prepared["b3"])
    return out[:B, :E]


def init_params(key, input_dim, hidden_dim1, hidden_dim2, embedding_dim):
    """Deterministic init mimicking nn.Linear's uniform(-1/sqrt(fan_in), 1/sqrt(fan_in))."""
    ks = jax.random.split(key, 6)

    def lin(kw, kb, fan_in, fan_out):
        bound = 1.0 / jnp.sqrt(fan_in)
        w = jax.random.uniform(kw, (fan_in, fan_out), jnp.float32, -bound, bound)
        b = jax.random.uniform(kb, (1, fan_out), jnp.float32, -bound, bound)
        return w, b

    w1, b1 = lin(ks[0], ks[1], input_dim, hidden_dim1)
    w2, b2 = lin(ks[2], ks[3], hidden_dim1, hidden_dim2)
    w3, b3 = lin(ks[4], ks[5], hidden_dim2, embedding_dim)
    return {"w1": w1, "b1": b1, "w2": w2, "b2": b2, "w3": w3, "b3": b3}


def encoder_ref(x, p):
    h1 = jnp.maximum(x @ p["w1"] + p["b1"], 0.0)
    h2 = jnp.maximum(h1 @ p["w2"] + p["b2"], 0.0)
    return h2 @ p["w3"] + p["b3"]


if __name__ == "__main__":
    # Module defaults: input_dim=28*28=784, hidden1=128, hidden2=16, embedding=2.
    input_dim, hidden_dim1, hidden_dim2, embedding_dim = 28 * 28, 128, 16, 2
    batch = 128   # small batch; tb picks 64 -> 2 grid steps (pipelined + dual-TC)

    key = jax.random.PRNGKey(0)
    k_x, k_p = jax.random.split(key)
    x = jax.random.normal(k_x, (batch, input_dim), jnp.float32)
    params = init_params(k_p, input_dim, hidden_dim1, hidden_dim2, embedding_dim)
    prepared = prepare_params(params)     # one-time bf16 conversion / lane padding

    out = jax.block_until_ready(encoder_forward(x, prepared))
    ref = encoder_ref(x, params)
    assert out.shape == (batch, embedding_dim)
    assert bool(jnp.all(jnp.isfinite(out)))
    # bf16 matmul operands with f32 accumulation -> loosened tolerance vs f32 ref.
    assert jnp.allclose(out, ref, atol=5e-2, rtol=5e-2)

    # Ragged small batch (not a multiple of 8 or of the tile): padded only to 8,
    # partial block handled by the grid, result sliced back.
    out_small = jax.block_until_ready(encoder_forward(x[:10], prepared))
    assert out_small.shape == (10, embedding_dim)
    assert jnp.allclose(out_small, ref[:10], atol=5e-2, rtol=5e-2)

    print("KERNEL_OK")
</pallas_src>

<mosaic_0001>
module attributes {stable_mosaic.version = 11 : i64} {
  func.func @encoder_kernel(%arg0: i32, %arg1: memref<64x784xf32, #tpu.memory_space<vmem>>, %arg2: memref<784x128xbf16, #tpu.memory_space<vmem>>, %arg3: memref<1x128xf32, #tpu.memory_space<vmem>>, %arg4: memref<128x128xbf16, #tpu.memory_space<vmem>>, %arg5: memref<1x128xf32, #tpu.memory_space<vmem>>, %arg6: memref<128x128xbf16, #tpu.memory_space<vmem>>, %arg7: memref<1x128xf32, #tpu.memory_space<vmem>>, %arg8: memref<64x128xf32, #tpu.memory_space<vmem>>) attributes {dimension_semantics = [#tpu.dimension_semantics<parallel>], iteration_bounds = array<i64: 2>, scalar_prefetch = 0 : i64, scratch_operands = 0 : i64, tpu.core_type = #tpu.core_type<tc>, window_params = [{transform_indices = @transform_0, window_bounds = array<i64: 64, 784>}, {pipeline_mode = #tpu.pipeline_mode<synchronous>, transform_indices = @transform_1, window_bounds = array<i64: 784, 128>}, {pipeline_mode = #tpu.pipeline_mode<synchronous>, transform_indices = @transform_2, window_bounds = array<i64: 1, 128>}, {pipeline_mode = #tpu.pipeline_mode<synchronous>, transform_indices = @transform_3, window_bounds = array<i64: 128, 128>}, {pipeline_mode = #tpu.pipeline_mode<synchronous>, transform_indices = @transform_4, window_bounds = array<i64: 1, 128>}, {pipeline_mode = #tpu.pipeline_mode<synchronous>, transform_indices = @transform_5, window_bounds = array<i64: 128, 128>}, {pipeline_mode = #tpu.pipeline_mode<synchronous>, transform_indices = @transform_6, window_bounds = array<i64: 1, 128>}, {transform_indices = @transform_7, window_bounds = array<i64: 64, 128>}]} {
    %c0 = arith.constant 0 : index
    %c0_0 = arith.constant 0 : index
    %0 = vector.load %arg1[%c0, %c0_0] : memref<64x784xf32, #tpu.memory_space<vmem>>, vector<64x784xf32>
    %1 = arith.truncf %0 : vector<64x784xf32> to vector<64x784xbf16>
    %c0_1 = arith.constant 0 : index
    %c0_2 = arith.constant 0 : index
    %2 = vector.load %arg2[%c0_1, %c0_2] : memref<784x128xbf16, #tpu.memory_space<vmem>>, vector<784x128xbf16>
    %cst = arith.constant dense<0.000000e+00> : vector<64x128xf32>
    %3 = tpu.matmul %1, %2, %cst {dimension_numbers = #tpu.dot_dimension_numbers<[1], [0], [0], [1], [0, 0, 1, 1], [], []>} : vector<64x784xbf16>, vector<784x128xbf16>, vector<64x128xf32> -> vector<64x128xf32>
    %c0_3 = arith.constant 0 : index
    %c0_4 = arith.constant 0 : index
    %4 = vector.load %arg3[%c0_3, %c0_4] : memref<1x128xf32, #tpu.memory_space<vmem>>, vector<1x128xf32>
    %5 = vector.broadcast %4 : vector<1x128xf32> to vector<64x128xf32>
    %6 = arith.addf %3, %5 : vector<64x128xf32>
    %cst_5 = arith.constant 0.000000e+00 : f32
    %7 = vector.broadcast %cst_5 : f32 to vector<64x128xf32>
    %8 = arith.maximumf %6, %7 : vector<64x128xf32>
    %9 = arith.truncf %8 : vector<64x128xf32> to vector<64x128xbf16>
    %c0_6 = arith.constant 0 : index
    %c0_7 = arith.constant 0 : index
    %10 = vector.load %arg4[%c0_6, %c0_7] : memref<128x128xbf16, #tpu.memory_space<vmem>>, vector<128x128xbf16>
    %cst_8 = arith.constant dense<0.000000e+00> : vector<64x128xf32>
    %11 = tpu.matmul %9, %10, %cst_8 {dimension_numbers = #tpu.dot_dimension_numbers<[1], [0], [0], [1], [0, 0, 1, 1], [], []>} : vector<64x128xbf16>, vector<128x128xbf16>, vector<64x128xf32> -> vector<64x128xf32>
    %c0_9 = arith.constant 0 : index
    %c0_10 = arith.constant 0 : index
    %12 = vector.load %arg5[%c0_9, %c0_10] : memref<1x128xf32, #tpu.memory_space<vmem>>, vector<1x128xf32>
    %13 = vector.broadcast %12 : vector<1x128xf32> to vector<64x128xf32>
    %14 = arith.addf %11, %13 : vector<64x128xf32>
    %cst_11 = arith.constant 0.000000e+00 : f32
    %15 = vector.broadcast %cst_11 : f32 to vector<64x128xf32>
    %16 = arith.maximumf %14, %15 : vector<64x128xf32>
    %17 = arith.truncf %16 : vector<64x128xf32> to vector<64x128xbf16>
    %c0_12 = arith.constant 0 : index
    %c0_13 = arith.constant 0 : index
    %18 = vector.load %arg6[%c0_12, %c0_13] : memref<128x128xbf16, #tpu.memory_space<vmem>>, vector<128x128xbf16>
    %cst_14 = arith.constant dense<0.000000e+00> : vector<64x128xf32>
    %19 = tpu.matmul %17, %18, %cst_14 {dimension_numbers = #tpu.dot_dimension_numbers<[1], [0], [0], [1], [0, 0, 1, 1], [], []>} : vector<64x128xbf16>, vector<128x128xbf16>, vector<64x128xf32> -> vector<64x128xf32>
    %c0_15 = arith.constant 0 : index
    %c0_16 = arith.constant 0 : index
    %20 = vector.load %arg7[%c0_15, %c0_16] : memref<1x128xf32, #tpu.memory_space<vmem>>, vector<1x128xf32>
    %21 = vector.broadcast %20 : vector<1x128xf32> to vector<64x128xf32>
    %22 = arith.addf %19, %21 : vector<64x128xf32>
    %c0_17 = arith.constant 0 : index
    %c0_18 = arith.constant 0 : index
    %23 = vector.load %arg8[%c0_17, %c0_18] : memref<64x128xf32, #tpu.memory_space<vmem>>, vector<64x128xf32>
    tpu.vector_store %arg8[%c0_17, %c0_18], %22 {strides = array<i32>} : memref<64x128xf32, #tpu.memory_space<vmem>>, vector<64x128xf32>,
    return
  }
  func.func @transform_0(%arg0: i32) -> (i32, i32) {
    %c0_i32 = arith.constant 0 : i32
    %c0_i32_0 = arith.constant 0 : i32
    return %arg0, %c0_i32 : i32, i32
  }
  func.func @transform_1(%arg0: i32) -> (i32, i32) {
    %c0_i32 = arith.constant 0 : i32
    %c0_i32_0 = arith.constant 0 : i32
    %c0_i32_1 = arith.constant 0 : i32
    return %c0_i32, %c0_i32_0 : i32, i32
  }
  func.func @transform_2(%arg0: i32) -> (i32, i32) {
    %c0_i32 = arith.constant 0 : i32
    %c0_i32_0 = arith.constant 0 : i32
    %c0_i32_1 = arith.constant 0 : i32
    return %c0_i32, %c0_i32_0 : i32, i32
  }
  func.func @transform_3(%arg0: i32) -> (i32, i32) {
    %c0_i32 = arith.constant 0 : i32
    %c0_i32_0 = arith.constant 0 : i32
    %c0_i32_1 = arith.constant 0 : i32
    return %c0_i32, %c0_i32_0 : i32, i32
  }
  func.func @transform_4(%arg0: i32) -> (i32, i32) {
    %c0_i32 = arith.constant 0 : i32
    %c0_i32_0 = arith.constant 0 : i32
    %c0_i32_1 = arith.constant 0 : i32
    return %c0_i32, %c0_i32_0 : i32, i32
  }
  func.func @transform_5(%arg0: i32) -> (i32, i32) {
    %c0_i32 = arith.constant 0 : i32
    %c0_i32_0 = arith.constant 0 : i32
    %c0_i32_1 = arith.constant 0 : i32
    return %c0_i32, %c0_i32_0 : i32, i32
  }
  func.func @transform_6(%arg0: i32) -> (i32, i32) {
    %c0_i32 = arith.constant 0 : i32
    %c0_i32_0 = arith.constant 0 : i32
    %c0_i32_1 = arith.constant 0 : i32
    return %c0_i32, %c0_i32_0 : i32, i32
  }
  func.func @transform_7(%arg0: i32) -> (i32, i32) {
    %c0_i32 = arith.constant 0 : i32
    %c0_i32_0 = arith.constant 0 : i32
    return %arg0, %c0_i32 : i32, i32
  }
}

</mosaic_0001>

<llo_original>
// kernel: tpu_custom_call.1
$region0: #{tpu_custom_call.1}
  #allocation0 [shape = 'u32[]', space=smem, size = 0x4, offset = 0x4, fixed_abs, tag = 'smem constant byte address 0x4 - core index']
  #allocation1 [shape = 'u32[144,128]{1,0:T(1,128)}', space=vmem, size = 0x12000, scoped, tag = 'internal scratch']
  %s0 = inlined_call_operand.vmem [shape: f32[128,784], index: 0, kind: input, shape index: {}]
  %s1 = inlined_call_operand.vmem [shape: bf16[784,128], index: 1, kind: input, shape index: {}]
  %s2 = inlined_call_operand.vmem [shape: f32[1,128], index: 2, kind: input, shape index: {}]
  %s3 = inlined_call_operand.vmem [shape: bf16[128,128], index: 3, kind: input, shape index: {}]
  %s4 = inlined_call_operand.vmem [shape: f32[1,128], index: 4, kind: input, shape index: {}]
  %s5 = inlined_call_operand.vmem [shape: bf16[128,128], index: 5, kind: input, shape index: {}]
  %s6 = inlined_call_operand.vmem [shape: f32[1,128], index: 6, kind: input, shape index: {}]
  %s7 = inlined_call_operand.hbm [shape: f32[128,128], index: 7, kind: output, shape index: {}]
  %s8 = sld [smem:[#allocation0]]
  $region61: #{tpu_custom_call.1} parent=0
    _
  %s10 = ssub.s32 1, %s8
  %s11 = scalar_select 0, %s10, %s8
  $region1: #{tpu_custom_call.1} parent=0
    #allocation2 [shape = 'u8[65536]{0}', space=vmem, size = 0x10000, scoped, tag = 'output window, operand 0']
    #allocation3 [shape = 's32[2]{0}', space=sflag, size = 0x8, scoped, tag = 'scoped memory for tpu_custom_call.1']
    %12 = vsyncpa [#allocation3], 0
    %s13 = scalar_lea.sflag [#allocation3], 1
    %14 = vsyncpa %s13, 0
    loop: start=0, step=1, limit=4
    $region2: #{tpu_custom_call.1} parent=1 // loop_pre_header
      _
    $region3: #{tpu_custom_call.1} parent=1 // loop_header
      %s16 = sphi 0, %s20
      %p17 = scmp.ge.s32.totalorder %s16, 4
      %s26 = sphi 0, %s28
      %s29 = sphi 0, %s26
      %s30 = sphi 0, %s29
      %s46 = sphi 0, %s30
      %s50 = sphi 0, %s50
      %s52 = sphi 0, %s50
      %s53 = sphi 0, %s52
      %s67 = sphi 0, %s53
      %s71 = sphi 0, %s71
      %s73 = sphi 0, %s71
      %s74 = sphi 0, %s73
      %s88 = sphi 0, %s74
      %s92 = sphi 0, %s92
      %s94 = sphi 0, %s92
      %s95 = sphi 0, %s94
      %s109 = sphi 0, %s95
      %s113 = sphi 0, %s113
      %s115 = sphi 0, %s113
      %s116 = sphi 0, %s115
      %s130 = sphi 0, %s116
      %s134 = sphi 0, %s134
      %s136 = sphi 0, %s134
      %s137 = sphi 0, %s136
      %s151 = sphi 0, %s137
      %s155 = sphi 0, %s155
      %s157 = sphi 0, %s155
      %s158 = sphi 0, %s157
      %s172 = sphi 0, %s158
      %s178 = sphi 0, %s180
      %s181 = sphi 0, %s178
      %s182 = sphi 0, %s181
      %s198 = sphi 0, %s182
    $region4: #{tpu_custom_call.1} parent=1 // loop_header_branch
      %19 = sbr.rel (%p17) target = $region8
    $region5: #{tpu_custom_call.1} parent=1 // loop_body
      %s21 = ssub.s32 %s16, 1
      %s22 = ssub.s32 %s16, 2
      %s23 = sadd.s32 %s16, 1
      %s24 = ssub.s32 %s16, %s23
      %p25 = scmp.eq.s32.totalorder %s24, 0
      %s27 = sadd.s32 %s26, 1
      %s28 = scalar_select %p25, %s26, %s27
      %p31 = pneg %p25
      %p32 = scmp.eq.s32.totalorder %s16, 1
      %p33 = por %p31, %p32
      %p34 = scmp.ne.s32.totalorder %s26, %s29
      %p35 = scmp.eq.s32.totalorder %s16, 0
      %p36 = por %p34, %p35
      %p37 = scmp.ne.s32.totalorder %s26, %s29
      %p38 = scmp.eq.s32.totalorder %s21, 1
      %p39 = por %p37, %p38
      %p40 = scmp.ne.s32.totalorder %s29, %s30
      %p41 = scmp.eq.s32.totalorder %s21, 0
      %p42 = por %p40, %p41
      %p43 = scmp.ne.s32.totalorder %s29, %s30
      %p44 = scmp.eq.s32.totalorder %s22, 1
      %p45 = por %p43, %p44
      %p47 = scmp.ne.s32.totalorder %s30, %s46
      %p48 = scmp.eq.s32.totalorder %s22, 0
      %p49 = por %p47, %p48
      %s51 = sadd.s32 %s50, 1
      %p54 = scmp.eq.s32.totalorder %s16, 1
      %p55 = scmp.ne.s32.totalorder %s50, %s52
      %p56 = scmp.eq.s32.totalorder %s16, 0
      %p57 = por %p55, %p56
      %p58 = scmp.ne.s32.totalorder %s50, %s52
      %p59 = scmp.eq.s32.totalorder %s21, 1
      %p60 = por %p58, %p59
      %p61 = scmp.ne.s32.totalorder %s52, %s53
      %p62 = scmp.eq.s32.totalorder %s21, 0
      %p63 = por %p61, %p62
      %p64 = scmp.ne.s32.totalorder %s52, %s53
      %p65 = scmp.eq.s32.totalorder %s22, 1
      %p66 = por %p64, %p65
      %p68 = scmp.ne.s32.totalorder %s53, %s67
      %p69 = scmp.eq.s32.totalorder %s22, 0
      %p70 = por %p68, %p69
      %s72 = sadd.s32 %s71, 1
      %p75 = scmp.eq.s32.totalorder %s16, 1
      %p76 = scmp.ne.s32.totalorder %s71, %s73
      %p77 = scmp.eq.s32.totalorder %s16, 0
      %p78 = por %p76, %p77
      %p79 = scmp.ne.s32.totalorder %s71, %s73
      %p80 = scmp.eq.s32.totalorder %s21, 1
      %p81 = por %p79, %p80
      %p82 = scmp.ne.s32.totalorder %s73, %s74
      %p83 = scmp.eq.s32.totalorder %s21, 0
      %p84 = por %p82, %p83
      %p85 = scmp.ne.s32.totalorder %s73, %s74
      %p86 = scmp.eq.s32.totalorder %s22, 1
      %p87 = por %p85, %p86
      %p89 = scmp.ne.s32.totalorder %s74, %s88
      %p90 = scmp.eq.s32.totalorder %s22, 0
      %p91 = por %p89, %p90
      %s93 = sadd.s32 %s92, 1
      %p96 = scmp.eq.s32.totalorder %s16, 1
      %p97 = scmp.ne.s32.totalorder %s92, %s94
      %p98 = scmp.eq.s32.totalorder %s16, 0
      %p99 = por %p97, %p98
      %p100 = scmp.ne.s32.totalorder %s92, %s94
      %p101 = scmp.eq.s32.totalorder %s21, 1
      %p102 = por %p100, %p101
      %p103 = scmp.ne.s32.totalorder %s94, %s95
      %p104 = scmp.eq.s32.totalorder %s21, 0
      %p105 = por %p103, %p104
      %p106 = scmp.ne.s32.totalorder %s94, %s95
      %p107 = scmp.eq.s32.totalorder %s22, 1
      %p108 = por %p106, %p107
      %p110 = scmp.ne.s32.totalorder %s95, %s109
      %p111 = scmp.eq.s32.totalorder %s22, 0
      %p112 = por %p110, %p111
      %s114 = sadd.s32 %s113, 1
      %p117 = scmp.eq.s32.totalorder %s16, 1
      %p118 = scmp.ne.s32.totalorder %s113, %s115
      %p119 = scmp.eq.s32.totalorder %s16, 0
      %p120 = por %p118, %p119
      %p121 = scmp.ne.s32.totalorder %s113, %s115
      %p122 = scmp.eq.s32.totalorder %s21, 1
      %p123 = por %p121, %p122
      %p124 = scmp.ne.s32.totalorder %s115, %s116
      %p125 = scmp.eq.s32.totalorder %s21, 0
      %p126 = por %p124, %p125
      %p127 = scmp.ne.s32.totalorder %s115, %s116
      %p128 = scmp.eq.s32.totalorder %s22, 1
      %p129 = por %p127, %p128
      %p131 = scmp.ne.s32.totalorder %s116, %s130
      %p132 = scmp.eq.s32.totalorder %s22, 0
      %p133 = por %p131, %p132
      %s135 = sadd.s32 %s134, 1
      %p138 = scmp.eq.s32.totalorder %s16, 1
      %p139 = scmp.ne.s32.totalorder %s134, %s136
      %p140 = scmp.eq.s32.totalorder %s16, 0
      %p141 = por %p139, %p140
      %p142 = scmp.ne.s32.totalorder %s134, %s136
      %p143 = scmp.eq.s32.totalorder %s21, 1
      %p144 = por %p142, %p143
      %p145 = scmp.ne.s32.totalorder %s136, %s137
      %p146 = scmp.eq.s32.totalorder %s21, 0
      %p147 = por %p145, %p146
      %p148 = scmp.ne.s32.totalorder %s136, %s137
      %p149 = scmp.eq.s32.totalorder %s22, 1
      %p150 = por %p148, %p149
      %p152 = scmp.ne.s32.totalorder %s137, %s151
      %p153 = scmp.eq.s32.totalorder %s22, 0
      %p154 = por %p152, %p153
      %s156 = sadd.s32 %s155, 1
      %p159 = scmp.eq.s32.totalorder %s16, 1
      %p160 = scmp.ne.s32.totalorder %s155, %s157
      %p161 = scmp.eq.s32.totalorder %s16, 0
      %p162 = por %p160, %p161
      %p163 = scmp.ne.s32.totalorder %s155, %s157
      %p164 = scmp.eq.s32.totalorder %s21, 1
      %p165 = por %p163, %p164
      %p166 = scmp.ne.s32.totalorder %s157, %s158
      %p167 = scmp.eq.s32.totalorder %s21, 0
      %p168 = por %p166, %p167
      %p169 = scmp.ne.s32.totalorder %s157, %s158
      %p170 = scmp.eq.s32.totalorder %s22, 1
      %p171 = por %p169, %p170
      %p173 = scmp.ne.s32.totalorder %s158, %s172
      %p174 = scmp.eq.s32.totalorder %s22, 0
      %p175 = por %p173, %p174
      %s176 = ssub.s32 %s16, %s23
      %p177 = scmp.eq.s32.totalorder %s176, 0
      %s179 = sadd.s32 %s178, 1
      %s180 = scalar_select %p177, %s178, %s179
      %p183 = pneg %p177
      %p184 = scmp.eq.s32.totalorder %s16, 1
      %p185 = por %p183, %p184
      %p186 = scmp.ne.s32.totalorder %s178, %s181
      %p187 = scmp.eq.s32.totalorder %s16, 0
      %p188 = por %p186, %p187
      %p189 = scmp.ne.s32.totalorder %s178, %s181
      %p190 = scmp.eq.s32.totalorder %s21, 1
      %p191 = por %p189, %p190
      %p192 = scmp.ne.s32.totalorder %s181, %s182
      %p193 = scmp.eq.s32.totalorder %s21, 0
      %p194 = por %p192, %p193
      %p195 = scmp.ne.s32.totalorder %s181, %s182
      %p196 = scmp.eq.s32.totalorder %s22, 1
      %p197 = por %p195, %p196
      %p199 = scmp.ne.s32.totalorder %s182, %s198
      %p200 = scmp.eq.s32.totalorder %s22, 0
      %p201 = por %p199, %p200
      %p202 = scmp.le.s32.totalorder 1, %s16
      %p203 = scmp.lt.s32.totalorder %s16, 3
      %p204 = pnand %p202, %p203
      %p205 = pneg %p204
      // Predicated region
      $region9: #{tpu_custom_call.1} parent=5 // pred_check
        _
      $region10: #{tpu_custom_call.1} parent=5 // pred_check_branch
        %207 = sbr.rel (%p204) target = $region12
      $region11: #{tpu_custom_call.1} parent=5 // pred_region
        %s208 = ssub.s32 %s16, 1
        // Predicated region
        $region13: #{tpu_custom_call.1} parent=11 // pred_check
          %p209 = pneg %p63
        $region14: #{tpu_custom_call.1} parent=11 // pred_check_branch
          %211 = sbr.rel (%p209) target = $region16
        $region15: #{tpu_custom_call.1} parent=11 // pred_region
          _
        $region16: #{tpu_custom_call.1} parent=11 // pred_fallthru
          _
        // Predicated region
        $region17: #{tpu_custom_call.1} parent=11 // pred_check
          %p212 = pneg %p84
        $region18: #{tpu_custom_call.1} parent=11 // pred_check_branch
          %214 = sbr.rel (%p212) target = $region20
        $region19: #{tpu_custom_call.1} parent=11 // pred_region
          _
        $region20: #{tpu_custom_call.1} parent=11 // pred_fallthru
          _
        // Predicated region
        $region21: #{tpu_custom_call.1} parent=11 // pred_check
          %p215 = pneg %p105
        $region22: #{tpu_custom_call.1} parent=11 // pred_check_branch
          %217 = sbr.rel (%p215) target = $region24
        $region23: #{tpu_custom_call.1} parent=11 // pred_region
          _
        $region24: #{tpu_custom_call.1} parent=11 // pred_fallthru
          _
        // Predicated region
        $region25: #{tpu_custom_call.1} parent=11 // pred_check
          %p218 = pneg %p126
        $region26: #{tpu_custom_call.1} parent=11 // pred_check_branch
          %220 = sbr.rel (%p218) target = $region28
        $region27: #{tpu_custom_call.1} parent=11 // pred_region
          _
        $region28: #{tpu_custom_call.1} parent=11 // pred_fallthru
          _
        // Predicated region
        $region29: #{tpu_custom_call.1} parent=11 // pred_check
          %p221 = pneg %p147
        $region30: #{tpu_custom_call.1} parent=11 // pred_check_branch
          %223 = sbr.rel (%p221) target = $region32
        $region31: #{tpu_custom_call.1} parent=11 // pred_region
          _
        $region32: #{tpu_custom_call.1} parent=11 // pred_fallthru
          _
        // Predicated region
        $region33: #{tpu_custom_call.1} parent=11 // pred_check
          %p224 = pneg %p168
        $region34: #{tpu_custom_call.1} parent=11 // pred_check_branch
          %226 = sbr.rel (%p224) target = $region36
        $region35: #{tpu_custom_call.1} parent=11 // pred_region
          _
        $region36: #{tpu_custom_call.1} parent=11 // pred_fallthru
          _
      $region12: #{tpu_custom_call.1} parent=5 // pred_fallthru
        _
      %p227 = scmp.lt.s32.totalorder %s16, 2
      // Predicated region
      $region37: #{tpu_custom_call.1} parent=5 // pred_check
        %p228 = pneg %p227
      $region38: #{tpu_custom_call.1} parent=5 // pred_check_branch
        %230 = sbr.rel (%p228) target = $region40
      $region39: #{tpu_custom_call.1} parent=5 // pred_region
        // Predicated region
        $region41: #{tpu_custom_call.1} parent=39 // pred_check
          %p231 = pneg %p36
        $region42: #{tpu_custom_call.1} parent=39 // pred_check_branch
          %233 = sbr.rel (%p231) target = $region44
        $region43: #{tpu_custom_call.1} parent=39 // pred_region
          %s234 = smul.u32 8, %s16
          %p235 = scmp.lt.s32.totalorder %s234, 15
          %s236 = scalar_select %p235, %s234, 15
          %s237 = smul.addr %s236, 7
          %s238 = smul.addr %s237, 8
          %s239 = scalar_lea.vmem %s0, %s238
          %s240 = smul.u32 8, %s16
        $region44: #{tpu_custom_call.1} parent=39 // pred_fallthru
          _
      $region40: #{tpu_custom_call.1} parent=5 // pred_fallthru
        _
      %p241 = scmp.le.s32.totalorder 1, %s16
      %p242 = scmp.lt.s32.totalorder %s16, 3
      %p243 = pnand %p241, %p242
      %p244 = pneg %p243
      // Predicated region
      $region45: #{tpu_custom_call.1} parent=5 // pred_check
        _
      $region46: #{tpu_custom_call.1} parent=5 // pred_check_branch
        %246 = sbr.rel (%p243) target = $region48
      $region47: #{tpu_custom_call.1} parent=5 // pred_region
        %s247 = ssub.s32 %s16, 1
        %s248 = smul.u32 8, %s21
        %p249 = scmp.lt.s32.totalorder %s248, 15
        %s250 = scalar_select %p249, %s248, 15
        %s251 = smul.addr %s250, 7
        %s252 = smul.addr %s251, 8
        %s253 = scalar_lea.vmem %s0, %s252
        %p254 = pneg %p42
        %p255 = pneg %p39
        %p256 = pneg %p63
        %p257 = pneg %p60
        %p258 = pneg %p84
        %p259 = pneg %p81
        %p260 = pneg %p105
        %p261 = pneg %p102
        %p262 = pneg %p126
        %p263 = pneg %p123
        %p264 = pneg %p147
        %p265 = pneg %p144
        %p266 = pneg %p168
        %p267 = pneg %p165
        %p268 = pneg %p194
        %p269 = pneg %p191
        %s270 = sand.u32 %s181, 1
        %s271 = scalar_lea.sflag [#allocation3], %s270
        %s272 = sand.u32 %s181, 1
        %s273 = smul.addr %s272, 64
        %s274 = scalar_lea.vmem [#allocation2], %s273
        %s275 = smul.u32 8, %s21
        %p276 = scmp.lt.s32.totalorder %s275, 15
        %s277 = scalar_select %p276, %s275, 15
        %s278 = smul.addr %s277, 7
        %s279 = smul.addr %s278, 8
        %s280 = scalar_lea.vmem %s0, %s279
        %s281 = smul.u32 8, %s21
        %s282 = smul.u32 8, %s21
        %v284 = vld [vmem:[%s280] sm:$0xff]
        %v285 = vld [vmem:[%s280 + $0x8] sm:$0xff]
        %v286 = vld [vmem:[%s280 + $0x10] sm:$0xff]
        %v287 = vld [vmem:[%s280 + $0x18] sm:$0xff]
        %v288 = vld [vmem:[%s280 + $0x20] sm:$0xff]
        %v289 = vld [vmem:[%s280 + $0x28] sm:$0xff]
        %v290 = vld [vmem:[%s280 + $0x30] sm:$0xff]
        %v291 = vld [vmem:[%s280 + $0x38] sm:$0xff]
        %v292 = vld [vmem:[%s280 + $0x40] sm:$0xff]
        %v293 = vld [vmem:[%s280 + $0x48] sm:$0xff]
        %v294 = vld [vmem:[%s280 + $0x50] sm:$0xff]
        %v295 = vld [vmem:[%s280 + $0x58] sm:$0xff]
        %v296 = vld [vmem:[%s280 + $0x60] sm:$0xff]
        %v297 = vld [vmem:[%s280 + $0x68] sm:$0xff]
        %v298 = vld [vmem:[%s280 + $0x70] sm:$0xff]
        %v299 = vld [vmem:[%s280 + $0x78] sm:$0xff]
        %v300 = vld [vmem:[%s280 + $0x80] sm:$0xff]
        %v301 = vld [vmem:[%s280 + $0x88] sm:$0xff]
        %v302 = vld [vmem:[%s280 + $0x90] sm:$0xff]
        %v303 = vld [vmem:[%s280 + $0x98] sm:$0xff]
        %v304 = vld [vmem:[%s280 + $0xa0] sm:$0xff]
        %v305 = vld [vmem:[%s280 + $0xa8] sm:$0xff]
        %v306 = vld [vmem:[%s280 + $0xb0] sm:$0xff]
        %v307 = vld [vmem:[%s280 + $0xb8] sm:$0xff]
        %v308 = vld [vmem:[%s280 + $0xc0] sm:$0xff]
        %v309 = vld [vmem:[%s280 + $0xc8] sm:$0xff]
        %v310 = vld [vmem:[%s280 + $0xd0] sm:$0xff]
        %v311 = vld [vmem:[%s280 + $0xd8] sm:$0xff]
        %v312 = vld [vmem:[%s280 + $0xe0] sm:$0xff]
        %v313 = vld [vmem:[%s280 + $0xe8] sm:$0xff]
        %v314 = vld [vmem:[%s280 + $0xf0] sm:$0xff]
        %v315 = vld [vmem:[%s280 + $0xf8] sm:$0xff]
        %v316 = vld [vmem:[%s280 + $0x100] sm:$0xff]
        %v317 = vld [vmem:[%s280 + $0x108] sm:$0xff]
        %v318 = vld [vmem:[%s280 + $0x110] sm:$0xff]
        %v319 = vld [vmem:[%s280 + $0x118] sm:$0xff]
        %v320 = vld [vmem:[%s280 + $0x120] sm:$0xff]
        %v321 = vld [vmem:[%s280 + $0x128] sm:$0xff]
        %v322 = vld [vmem:[%s280 + $0x130] sm:$0xff]
        %v323 = vld [vmem:[%s280 + $0x138] sm:$0xff]
        %v324 = vld [vmem:[%s280 + $0x140] sm:$0xff]
        %v325 = vld [vmem:[%s280 + $0x148] sm:$0xff]
        %v326 = vld [vmem:[%s280 + $0x150] sm:$0xff]
        %v327 = vld [vmem:[%s280 + $0x158] sm:$0xff]
        %v328 = vld [vmem:[%s280 + $0x160] sm:$0xff]
        %v329 = vld [vmem:[%s280 + $0x168] sm:$0xff]
        %v330 = vld [vmem:[%s280 + $0x170] sm:$0xff]
        %v331 = vld [vmem:[%s280 + $0x178] sm:$0xff]
        %v332 = vld [vmem:[%s280 + $0x180] sm:$0xff]
        %v333 = vld [vmem:[%s280 + $0x188] sm:$0xff]
        %v334 = vld [vmem:[%s280 + $0x190] sm:$0xff]
        %v335 = vld [vmem:[%s280 + $0x198] sm:$0xff]
        %v336 = vld [vmem:[%s280 + $0x1a0] sm:$0xff]
        %v337 = vld [vmem:[%s280 + $0x1a8] sm:$0xff]
        %v338 = vld [vmem:[%s280 + $0x1b0] sm:$0xff]
        %v339 = vld [vmem:[%s280 + $0x1b8] sm:$0xff]
        %v340 = vpack.c.bf16 %v291, %v284
        %v341 = vpack.c.bf16 %v292, %v285
        %v342 = vpack.c.bf16 %v293, %v286
        %v343 = vpack.c.bf16 %v294, %v287
        %v344 = vpack.c.bf16 %v295, %v288
        %v345 = vpack.c.bf16 %v296, %v289
        %v346 = vpack.c.bf16 %v297, %v290
        %v347 = vpack.c.bf16 %v305, %v298
        %v348 = vpack.c.bf16 %v306, %v299
        %v349 = vpack.c.bf16 %v307, %v300
        %v350 = vpack.c.bf16 %v308, %v301
        %v351 = vpack.c.bf16 %v309, %v302
        %v352 = vpack.c.bf16 %v310, %v303
        %v353 = vpack.c.bf16 %v311, %v304
        %v354 = vpack.c.bf16 %v319, %v312
        %v355 = vpack.c.bf16 %v320, %v313
        %v356 = vpack.c.bf16 %v321, %v314
        %v357 = vpack.c.bf16 %v322, %v315
        %v358 = vpack.c.bf16 %v323, %v316
        %v359 = vpack.c.bf16 %v324, %v317
        %v360 = vpack.c.bf16 %v325, %v318
        %v361 = vpack.c.bf16 %v333, %v326
        %v362 = vpack.c.bf16 %v334, %v327
        %v363 = vpack.c.bf16 %v335, %v328
        %v364 = vpack.c.bf16 %v336, %v329
        %v365 = vpack.c.bf16 %v337, %v330
        %v366 = vpack.c.bf16 %v338, %v331
        %v367 = vpack.c.bf16 %v339, %v332
        %v368 = vld [vmem:[%s1] sm:$0xf]
        %v369 = vld [vmem:[%s1 + $0x4] sm:$0xf]
        %v370 = vld [vmem:[%s1 + $0x8] sm:$0xf]
        %v371 = vld [vmem:[%s1 + $0xc] sm:$0xf]
        %v372 = vld [vmem:[%s1 + $0x10] sm:$0xf]
        %v373 = vld [vmem:[%s1 + $0x14] sm:$0xf]
        %v374 = vld [vmem:[%s1 + $0x18] sm:$0xf]
        %v375 = vld [vmem:[%s1 + $0x1c] sm:$0xf]
        %v376 = vld [vmem:[%s1 + $0x20] sm:$0xf]
        %v377 = vld [vmem:[%s1 + $0x24] sm:$0xf]
        %v378 = vld [vmem:[%s1 + $0x28] sm:$0xf]
        %v379 = vld [vmem:[%s1 + $0x2c] sm:$0xf]
        %v380 = vld [vmem:[%s1 + $0x30] sm:$0xf]
        %v381 = vld [vmem:[%s1 + $0x34] sm:$0xf]
        %v382 = vld [vmem:[%s1 + $0x38] sm:$0xf]
        %v383 = vld [vmem:[%s1 + $0x3c] sm:$0xf]
        %v384 = vld [vmem:[%s1 + $0x40] sm:$0xf]
        %v385 = vld [vmem:[%s1 + $0x44] sm:$0xf]
        %v386 = vld [vmem:[%s1 + $0x48] sm:$0xf]
        %v387 = vld [vmem:[%s1 + $0x4c] sm:$0xf]
        %v388 = vld [vmem:[%s1 + $0x50] sm:$0xf]
        %v389 = vld [vmem:[%s1 + $0x54] sm:$0xf]
        %v390 = vld [vmem:[%s1 + $0x58] sm:$0xf]
        %v391 = vld [vmem:[%s1 + $0x5c] sm:$0xf]
        %v392 = vld [vmem:[%s1 + $0x60] sm:$0xf]
        %v393 = vld [vmem:[%s1 + $0x64] sm:$0xf]
        %v394 = vld [vmem:[%s1 + $0x68] sm:$0xf]
        %v395 = vld [vmem:[%s1 + $0x6c] sm:$0xf]
        %v396 = vld [vmem:[%s1 + $0x70] sm:$0xf]
        %v397 = vld [vmem:[%s1 + $0x74] sm:$0xf]
        %v398 = vld [vmem:[%s1 + $0x78] sm:$0xf]
        %v399 = vld [vmem:[%s1 + $0x7c] sm:$0xf]
        %v400 = vld [vmem:[%s1 + $0x80] sm:$0xf]
        %v401 = vld [vmem:[%s1 + $0x84] sm:$0xf]
        %v402 = vld [vmem:[%s1 + $0x88] sm:$0xf]
        %v403 = vld [vmem:[%s1 + $0x8c] sm:$0xf]
        %v404 = vld [vmem:[%s1 + $0x90] sm:$0xf]
        %v405 = vld [vmem:[%s1 + $0x94] sm:$0xf]
        %v406 = vld [vmem:[%s1 + $0x98] sm:$0xf]
        %v407 = vld [vmem:[%s1 + $0x9c] sm:$0xf]
        %v408 = vld [vmem:[%s1 + $0xa0] sm:$0xf]
        %v409 = vld [vmem:[%s1 + $0xa4] sm:$0xf]
        %v410 = vld [vmem:[%s1 + $0xa8] sm:$0xf]
        %v411 = vld [vmem:[%s1 + $0xac] sm:$0xf]
        %v412 = vld [vmem:[%s1 + $0xb0] sm:$0xf]
        %v413 = vld [vmem:[%s1 + $0xb4] sm:$0xf]
        %v414 = vld [vmem:[%s1 + $0xb8] sm:$0xf]
        %v415 = vld [vmem:[%s1 + $0xbc] sm:$0xf]
        %v416 = vld [vmem:[%s1 + $0xc0] sm:$0xf]
        %v417 = vld [vmem:[%s1 + $0xc4] sm:$0xf]
        %v418 = vld [vmem:[%s1 + $0xc8] sm:$0xf]
        %v419 = vld [vmem:[%s1 + $0xcc] sm:$0xf]
        %v420 = vld [vmem:[%s1 + $0xd0] sm:$0xf]
        %v421 = vld [vmem:[%s1 + $0xd4] sm:$0xf]
        %v422 = vld [vmem:[%s1 + $0xd8] sm:$0xf]
        %v423 = vld [vmem:[%s1 + $0xdc] sm:$0xf]
        %v424 = vld [vmem:[%s1 + $0xe0] sm:$0xf]
        %v425 = vld [vmem:[%s1 + $0xe4] sm:$0xf]
        %v426 = vld [vmem:[%s1 + $0xe8] sm:$0xf]
        %v427 = vld [vmem:[%s1 + $0xec] sm:$0xf]
        %v428 = vld [vmem:[%s1 + $0xf0] sm:$0xf]
        %v429 = vld [vmem:[%s1 + $0xf4] sm:$0xf]
        %v430 = vld [vmem:[%s1 + $0xf8] sm:$0xf]
        %v431 = vld [vmem:[%s1 + $0xfc] sm:$0xf]
        %v432 = vld [vmem:[%s1 + $0x100] sm:$0xf]
        %v433 = vld [vmem:[%s1 + $0x104] sm:$0xf]
        %v434 = vld [vmem:[%s1 + $0x108] sm:$0xf]
        %v435 = vld [vmem:[%s1 + $0x10c] sm:$0xf]
        %v436 = vld [vmem:[%s1 + $0x110] sm:$0xf]
        %v437 = vld [vmem:[%s1 + $0x114] sm:$0xf]
        %v438 = vld [vmem:[%s1 + $0x118] sm:$0xf]
        %v439 = vld [vmem:[%s1 + $0x11c] sm:$0xf]
        %v440 = vld [vmem:[%s1 + $0x120] sm:$0xf]
        %v441 = vld [vmem:[%s1 + $0x124] sm:$0xf]
        %v442 = vld [vmem:[%s1 + $0x128] sm:$0xf]
        %v443 = vld [vmem:[%s1 + $0x12c] sm:$0xf]
        %v444 = vld [vmem:[%s1 + $0x130] sm:$0xf]
        %v445 = vld [vmem:[%s1 + $0x134] sm:$0xf]
        %v446 = vld [vmem:[%s1 + $0x138] sm:$0xf]
        %v447 = vld [vmem:[%s1 + $0x13c] sm:$0xf]
        %v448 = vld [vmem:[%s1 + $0x140] sm:$0xf]
        %v449 = vld [vmem:[%s1 + $0x144] sm:$0xf]
        %v450 = vld [vmem:[%s1 + $0x148] sm:$0xf]
        %v451 = vld [vmem:[%s1 + $0x14c] sm:$0xf]
        %v452 = vld [vmem:[%s1 + $0x150] sm:$0xf]
        %v453 = vld [vmem:[%s1 + $0x154] sm:$0xf]
        %v454 = vld [vmem:[%s1 + $0x158] sm:$0xf]
        %v455 = vld [vmem:[%s1 + $0x15c] sm:$0xf]
        %v456 = vld [vmem:[%s1 + $0x160] sm:$0xf]
        %v457 = vld [vmem:[%s1 + $0x164] sm:$0xf]
        %v458 = vld [vmem:[%s1 + $0x168] sm:$0xf]
        %v459 = vld [vmem:[%s1 + $0x16c] sm:$0xf]
        %v460 = vld [vmem:[%s1 + $0x170] sm:$0xf]
        %v461 = vld [vmem:[%s1 + $0x174] sm:$0xf]
        %v462 = vld [vmem:[%s1 + $0x178] sm:$0xf]
        %v463 = vld [vmem:[%s1 + $0x17c] sm:$0xf]
        %v464 = vld [vmem:[%s1 + $0x180] sm:$0xf]
        %v465 = vld [vmem:[%s1 + $0x184] sm:$0xf]
        %v466 = vld [vmem:[%s2] sm:$0x1]
        %v468 = vlaneseq
        %v469 = vshrl.u32 %v468, 7
        %v470 = vsub.s32 0, %v469
        %v471 = vrot.slane %v466, %v470
        %v571 = vunpack.c.l.b16 %v368
        %v572 = vunpack.c.l.b16 %v369
        %v573 = vunpack.c.l.b16 %v370
        %v574 = vunpack.c.l.b16 %v371
        %v575 = vunpack.c.l.b16 %v372
        %v576 = vunpack.c.l.b16 %v373
        %v577 = vunpack.c.l.b16 %v374
        %v578 = vunpack.c.l.b16 %v375
        %v579 = vunpack.c.l.b16 %v376
        %v580 = vunpack.c.l.b16 %v377
        %v581 = vunpack.c.l.b16 %v378
        %v582 = vunpack.c.l.b16 %v379
        %v583 = vunpack.c.l.b16 %v380
        %v584 = vunpack.c.l.b16 %v381
        %v585 = vunpack.c.l.b16 %v382
        %v586 = vunpack.c.l.b16 %v383
        %v587 = vunpack.c.l.b16 %v384
        %v588 = vunpack.c.l.b16 %v385
        %v589 = vunpack.c.l.b16 %v386
        %v590 = vunpack.c.l.b16 %v387
        %v591 = vunpack.c.l.b16 %v388
        %v592 = vunpack.c.l.b16 %v389
        %v593 = vunpack.c.l.b16 %v390
        %v594 = vunpack.c.l.b16 %v391
        %v595 = vunpack.c.l.b16 %v392
        %v596 = vunpack.c.l.b16 %v393
        %v597 = vunpack.c.l.b16 %v394
        %v598 = vunpack.c.l.b16 %v395
        %v599 = vunpack.c.l.b16 %v396
        %v600 = vunpack.c.l.b16 %v397
        %v601 = vunpack.c.l.b16 %v398
        %v602 = vunpack.c.l.b16 %v399
        %v603 = vunpack.c.l.b16 %v400
        %v604 = vunpack.c.l.b16 %v401
        %v605 = vunpack.c.l.b16 %v402
        %v606 = vunpack.c.l.b16 %v403
        %v607 = vunpack.c.l.b16 %v404
        %v608 = vunpack.c.l.b16 %v405
        %v609 = vunpack.c.l.b16 %v406
        %v610 = vunpack.c.l.b16 %v407
        %v611 = vunpack.c.l.b16 %v408
        %v612 = vunpack.c.l.b16 %v409
        %v613 = vunpack.c.l.b16 %v410
        %v614 = vunpack.c.l.b16 %v411
        %v615 = vunpack.c.l.b16 %v412
        %v616 = vunpack.c.l.b16 %v413
        %v617 = vunpack.c.l.b16 %v414
        %v618 = vunpack.c.l.b16 %v415
        %v619 = vunpack.c.l.b16 %v416
        %v620 = vunpack.c.l.b16 %v417
        %v621 = vunpack.c.l.b16 %v418
        %v622 = vunpack.c.l.b16 %v419
        %v623 = vunpack.c.l.b16 %v420
        %v624 = vunpack.c.l.b16 %v421
        %v625 = vunpack.c.l.b16 %v422
        %v626 = vunpack.c.l.b16 %v423
        %v627 = vunpack.c.l.b16 %v424
        %v628 = vunpack.c.l.b16 %v425
        %v629 = vunpack.c.l.b16 %v426
        %v630 = vunpack.c.l.b16 %v427
        %v631 = vunpack.c.l.b16 %v428
        %v632 = vunpack.c.l.b16 %v429
        %v633 = vunpack.c.l.b16 %v430
        %v634 = vunpack.c.l.b16 %v431
        %v635 = vunpack.c.l.b16 %v432
        %v636 = vunpack.c.l.b16 %v433
        %v637 = vunpack.c.l.b16 %v434
        %v638 = vunpack.c.l.b16 %v435
        %v639 = vunpack.c.l.b16 %v436
        %v640 = vunpack.c.l.b16 %v437
        %v641 = vunpack.c.l.b16 %v438
        %v642 = vunpack.c.l.b16 %v439
        %v643 = vunpack.c.l.b16 %v440
        %v644 = vunpack.c.l.b16 %v441
        %v645 = vunpack.c.l.b16 %v442
        %v646 = vunpack.c.l.b16 %v443
        %v647 = vunpack.c.l.b16 %v444
        %v648 = vunpack.c.l.b16 %v445
        %v649 = vunpack.c.l.b16 %v446
        %v650 = vunpack.c.l.b16 %v447
        %v651 = vunpack.c.l.b16 %v448
        %v652 = vunpack.c.l.b16 %v449
        %v653 = vunpack.c.l.b16 %v450
        %v654 = vunpack.c.l.b16 %v451
        %v655 = vunpack.c.l.b16 %v452
        %v656 = vunpack.c.l.b16 %v453
        %v657 = vunpack.c.l.b16 %v454
        %v658 = vunpack.c.l.b16 %v455
        %v659 = vunpack.c.l.b16 %v456
        %v660 = vunpack.c.l.b16 %v457
        %v661 = vunpack.c.l.b16 %v458
        %v662 = vunpack.c.l.b16 %v459
        %v663 = vunpack.c.l.b16 %v460
        %v664 = vunpack.c.l.b16 %v461
        %v665 = vunpack.c.l.b16 %v462
        %v666 = vunpack.c.l.b16 %v463
        %v667 = vunpack.c.l.b16 %v464
        %v668 = vunpack.c.l.b16 %v465
        %v669 = vpack.c.b16 %v572, %v571
        %v670 = vpack.c.b16 %v574, %v573
        %v671 = vpack.c.b16 %v576, %v575
        %v672 = vpack.c.b16 %v578, %v577
        %v673 = vpack.c.b16 %v580, %v579
        %v674 = vpack.c.b16 %v582, %v581
        %v675 = vpack.c.b16 %v584, %v583
        %v676 = vpack.c.b16 %v586, %v585
        %v677 = vpack.c.b16 %v588, %v587
        %v678 = vpack.c.b16 %v590, %v589
        %v679 = vpack.c.b16 %v592, %v591
        %v680 = vpack.c.b16 %v594, %v593
        %v681 = vpack.c.b16 %v596, %v595
        %v682 = vpack.c.b16 %v598, %v597
        %v683 = vpack.c.b16 %v600, %v599
        %v684 = vpack.c.b16 %v602, %v601
        %v685 = vpack.c.b16 %v604, %v603
        %v686 = vpack.c.b16 %v606, %v605
        %v687 = vpack.c.b16 %v608, %v607
        %v688 = vpack.c.b16 %v610, %v609
        %v689 = vpack.c.b16 %v612, %v611
        %v690 = vpack.c.b16 %v614, %v613
        %v691 = vpack.c.b16 %v616, %v615
        %v692 = vpack.c.b16 %v618, %v617
        %v693 = vpack.c.b16 %v620, %v619
        %v694 = vpack.c.b16 %v622, %v621
        %v695 = vpack.c.b16 %v624, %v623
        %v696 = vpack.c.b16 %v626, %v625
        %v697 = vpack.c.b16 %v628, %v627
        %v698 = vpack.c.b16 %v630, %v629
        %v699 = vpack.c.b16 %v632, %v631
        %v700 = vpack.c.b16 %v634, %v633
        %v701 = vpack.c.b16 %v636, %v635
        %v702 = vpack.c.b16 %v638, %v637
        %v703 = vpack.c.b16 %v640, %v639
        %v704 = vpack.c.b16 %v642, %v641
        %v705 = vpack.c.b16 %v644, %v643
        %v706 = vpack.c.b16 %v646, %v645
        %v707 = vpack.c.b16 %v648, %v647
        %v708 = vpack.c.b16 %v650, %v649
        %v709 = vpack.c.b16 %v652, %v651
        %v710 = vpack.c.b16 %v654, %v653
        %v711 = vpack.c.b16 %v656, %v655
        %v712 = vpack.c.b16 %v658, %v657
        %v713 = vpack.c.b16 %v660, %v659
        %v714 = vpack.c.b16 %v662, %v661
        %v715 = vpack.c.b16 %v664, %v663
        %v716 = vpack.c.b16 %v666, %v665
        %v717 = vpack.c.b16 %v668, %v667
        %vm767 = vcmask 130048
        %v769 = vsel %vm767, %v346, 0
        %v772 = vsel %vm767, %v353, 0
        %v775 = vsel %vm767, %v360, 0
        %v778 = vsel %vm767, %v367, 0
        %780 = vmatprep.subr.bf16.mxu0 0
        %781 = vmatpush1.bf16.msra.mxu0 %v669
        %782 = vmatprep.subr.bf16.mxu0 0
        %783 = vmatpush1.bf16.msra.mxu0 %v670
        %784 = vmatprep.subr.bf16.mxu0 0
        %785 = vmatpush1.bf16.msra.mxu0 %v671
        %786 = vmatprep.subr.bf16.mxu0 0
        %787 = vmatpush1.bf16.msra.mxu0 %v672
        %788 = vmatprep.subr.bf16.mxu0 0
        %789 = vmatpush1.bf16.msra.mxu0 %v673
        %790 = vmatprep.subr.bf16.mxu0 0
        %791 = vmatpush1.bf16.msra.mxu0 %v674
        %792 = vmatprep.subr.bf16.mxu0 0
        %793 = vmatpush1.bf16.msra.mxu0 %v675
        %794 = vmatprep.subr.bf16.mxu0 0
        %795 = vmatpush1.bf16.msra.mxu0 %v676
        %796 = vmatprep.subr.bf16.mxu0 0
        %797 = vmatpush1.bf16.msra.mxu0 %v677
        %798 = vmatprep.subr.bf16.mxu0 0
        %799 = vmatpush1.bf16.msra.mxu0 %v678
        %800 = vmatprep.subr.bf16.mxu0 0
        %801 = vmatpush1.bf16.msra.mxu0 %v679
        %802 = vmatprep.subr.bf16.mxu0 0
        %803 = vmatpush1.bf16.msra.mxu0 %v680
        %804 = vmatprep.subr.bf16.mxu0 0
        %805 = vmatpush1.bf16.msra.mxu0 %v681
        %806 = vmatprep.subr.bf16.mxu0 0
        %807 = vmatpush1.bf16.msra.mxu0 %v682
        %808 = vmatprep.subr.bf16.mxu0 0
        %809 = vmatpush1.bf16.msra.mxu0 %v683
        %810 = vmatprep.subr.bf16.mxu0 0
        %811 = vmatpush1.bf16.msra.mxu0 %v684
        %812 = vmatprep.mubr.bf16.mxu0 %v341
        %813 = vmatmul.mubr.bf16.gmra.mrb[0].mxu0 %v340
        %v814 = vpop.f32.mrb[0].mxu0
        %v815 = vadd.f32 %v471, %v814
        %v816 = vpop.f32.mrb[0].mxu0
        %v817 = vpop.f32.mrb[0].mxu0
        %v818 = vadd.f32 %v471, %v817
        %v819 = vpop.f32.mrb[0].mxu0
        %820 = vmatprep.mubr.bf16.mxu0 %v348
        %821 = vmatmul.mubr.bf16.gmra.mrb[0].mxu0 %v347
        %v822 = vpop.f32.mrb[0].mxu0
        %v823 = vadd.f32 %v471, %v822
        %v824 = vpop.f32.mrb[0].mxu0
        %v825 = vpop.f32.mrb[0].mxu0
        %v826 = vadd.f32 %v471, %v825
        %v827 = vpop.f32.mrb[0].mxu0
        %828 = vmatprep.mubr.bf16.mxu0 %v355
        %829 = vmatmul.mubr.bf16.gmra.mrb[0].mxu0 %v354
        %v830 = vpop.f32.mrb[0].mxu0
        %v831 = vadd.f32 %v471, %v830
        %v832 = vpop.f32.mrb[0].mxu0
        %v833 = vpop.f32.mrb[0].mxu0
        %v834 = vadd.f32 %v471, %v833
        %v835 = vpop.f32.mrb[0].mxu0
        %836 = vmatprep.mubr.bf16.mxu0 %v362
        %837 = vmatmul.mubr.bf16.gmra.mrb[0].mxu0 %v361
        %v838 = vpop.f32.mrb[0].mxu0
        %v839 = vadd.f32 %v471, %v838
        %v840 = vpop.f32.mrb[0].mxu0
        %v841 = vpop.f32.mrb[0].mxu0
        %v842 = vadd.f32 %v471, %v841
        %v843 = vpop.f32.mrb[0].mxu0
        %844 = vdwg.mxu0
        %845 = vmatprep.subr.bf16.mxu0 0
        %846 = vmatpush1.bf16.msra.mxu0 %v685
        %847 = vmatprep.subr.bf16.mxu0 0
        %848 = vmatpush1.bf16.msra.mxu0 %v686
        %849 = vmatprep.subr.bf16.mxu0 0
        %850 = vmatpush1.bf16.msra.mxu0 %v687
        %851 = vmatprep.subr.bf16.mxu0 0
        %852 = vmatpush1.bf16.msra.mxu0 %v688
        %853 = vmatprep.subr.bf16.mxu0 0
        %854 = vmatpush1.bf16.msra.mxu0 %v689
        %855 = vmatprep.subr.bf16.mxu0 0
        %856 = vmatpush1.bf16.msra.mxu0 %v690
        %857 = vmatprep.subr.bf16.mxu0 0
        %858 = vmatpush1.bf16.msra.mxu0 %v691
        %859 = vmatprep.subr.bf16.mxu0 0
        %860 = vmatpush1.bf16.msra.mxu0 %v692
        %861 = vmatprep.subr.bf16.mxu0 0
        %862 = vmatpush1.bf16.msra.mxu0 %v693
        %863 = vmatprep.subr.bf16.mxu0 0
        %864 = vmatpush1.bf16.msra.mxu0 %v694
        %865 = vmatprep.subr.bf16.mxu0 0
        %866 = vmatpush1.bf16.msra.mxu0 %v695
        %867 = vmatprep.subr.bf16.mxu0 0
        %868 = vmatpush1.bf16.msra.mxu0 %v696
        %869 = vmatprep.subr.bf16.mxu0 0
        %870 = vmatpush1.bf16.msra.mxu0 %v697
        %871 = vmatprep.subr.bf16.mxu0 0
        %872 = vmatpush1.bf16.msra.mxu0 %v698
        %873 = vmatprep.subr.bf16.mxu0 0
        %874 = vmatpush1.bf16.msra.mxu0 %v699
        %875 = vmatprep.subr.bf16.mxu0 0
        %876 = vmatpush1.bf16.msra.mxu0 %v700
        %877 = vmatprep.mubr.bf16.mxu0 %v343
        %878 = vmatmul.mubr.bf16.gmra.mrb[0].mxu0 %v342
        %v879 = vpop.f32.mrb[0].mxu0
        %v880 = vadd.f32 %v815, %v879
        %v881 = vpop.f32.mrb[0].mxu0
        %v882 = vpop.f32.mrb[0].mxu0
        %v883 = vadd.f32 %v818, %v882
        %v884 = vpop.f32.mrb[0].mxu0
        %885 = vmatprep.mubr.bf16.mxu0 %v350
        %886 = vmatmul.mubr.bf16.gmra.mrb[0].mxu0 %v349
        %v887 = vpop.f32.mrb[0].mxu0
        %v888 = vadd.f32 %v823, %v887
        %v889 = vpop.f32.mrb[0].mxu0
        %v890 = vpop.f32.mrb[0].mxu0
        %v891 = vadd.f32 %v826, %v890
        %v892 = vpop.f32.mrb[0].mxu0
        %893 = vmatprep.mubr.bf16.mxu0 %v357
        %894 = vmatmul.mubr.bf16.gmra.mrb[0].mxu0 %v356
        %v895 = vpop.f32.mrb[0].mxu0
        %v896 = vadd.f32 %v831, %v895
        %v897 = vpop.f32.mrb[0].mxu0
        %v898 = vpop.f32.mrb[0].mxu0
        %v899 = vadd.f32 %v834, %v898
        %v900 = vpop.f32.mrb[0].mxu0
        %901 = vmatprep.mubr.bf16.mxu0 %v364
        %902 = vmatmul.mubr.bf16.gmra.mrb[0].mxu0 %v363
        %v903 = vpop.f32.mrb[0].mxu0
        %v904 = vadd.f32 %v839, %v903
        %v905 = vpop.f32.mrb[0].mxu0
        %v906 = vpop.f32.mrb[0].mxu0
        %v907 = vadd.f32 %v842, %v906
        %v908 = vpop.f32.mrb[0].mxu0
        %909 = vdwg.mxu0
        %910 = vmatprep.subr.bf16.mxu0 0
        %911 = vmatpush1.bf16.msra.mxu0 %v701
        %912 = vmatprep.subr.bf16.mxu0 0
        %913 = vmatpush1.bf16.msra.mxu0 %v702
        %914 = vmatprep.subr.bf16.mxu0 0
        %915 = vmatpush1.bf16.msra.mxu0 %v703
        %916 = vmatprep.subr.bf16.mxu0 0
        %917 = vmatpush1.bf16.msra.mxu0 %v704
        %918 = vmatprep.subr.bf16.mxu0 0
        %919 = vmatpush1.bf16.msra.mxu0 %v705
        %920 = vmatprep.subr.bf16.mxu0 0
        %921 = vmatpush1.bf16.msra.mxu0 %v706
        %922 = vmatprep.subr.bf16.mxu0 0
        %923 = vmatpush1.bf16.msra.mxu0 %v707
        %924 = vmatprep.subr.bf16.mxu0 0
        %925 = vmatpush1.bf16.msra.mxu0 %v708
        %926 = vmatprep.subr.bf16.mxu0 0
        %927 = vmatpush1.bf16.msra.mxu0 %v709
        %928 = vmatprep.subr.bf16.mxu0 0
        %929 = vmatpush1.bf16.msra.mxu0 %v710
        %930 = vmatprep.subr.bf16.mxu0 0
        %931 = vmatpush1.bf16.msra.mxu0 %v711
        %932 = vmatprep.subr.bf16.mxu0 0
        %933 = vmatpush1.bf16.msra.mxu0 %v712
        %934 = vmatprep.subr.bf16.mxu0 0
        %935 = vmatpush1.bf16.msra.mxu0 %v713
        %936 = vmatprep.subr.bf16.mxu0 0
        %937 = vmatpush1.bf16.msra.mxu0 %v714
        %938 = vmatprep.subr.bf16.mxu0 0
        %939 = vmatpush1.bf16.msra.mxu0 %v715
        %940 = vmatprep.subr.bf16.mxu0 0
        %941 = vmatpush1.bf16.msra.mxu0 %v716
        %942 = vmatprep.mubr.bf16.mxu0 %v345
        %943 = vmatmul.mubr.bf16.gmra.mrb[0].mxu0 %v344
        %v944 = vpop.f32.mrb[0].mxu0
        %v945 = vadd.f32 %v880, %v944
        %v946 = vpop.f32.mrb[0].mxu0
        %v947 = vpop.f32.mrb[0].mxu0
        %v948 = vadd.f32 %v883, %v947
        %v949 = vpop.f32.mrb[0].mxu0
        %950 = vmatprep.mubr.bf16.mxu0 %v352
        %951 = vmatmul.mubr.bf16.gmra.mrb[0].mxu0 %v351
        %v952 = vpop.f32.mrb[0].mxu0
        %v953 = vadd.f32 %v888, %v952
        %v954 = vpop.f32.mrb[0].mxu0
        %v955 = vpop.f32.mrb[0].mxu0
        %v956 = vadd.f32 %v891, %v955
        %v957 = vpop.f32.mrb[0].mxu0
        %958 = vmatprep.mubr.bf16.mxu0 %v359
        %959 = vmatmul.mubr.bf16.gmra.mrb[0].mxu0 %v358
        %v960 = vpop.f32.mrb[0].mxu0
        %v961 = vadd.f32 %v896, %v960
        %v962 = vpop.f32.mrb[0].mxu0
        %v963 = vpop.f32.mrb[0].mxu0
        %v964 = vadd.f32 %v899, %v963
        %v965 = vpop.f32.mrb[0].mxu0
        %966 = vmatprep.mubr.bf16.mxu0 %v366
        %967 = vmatmul.mubr.bf16.gmra.mrb[0].mxu0 %v365
        %v968 = vpop.f32.mrb[0].mxu0
        %v969 = vadd.f32 %v904, %v968
        %v970 = vpop.f32.mrb[0].mxu0
        %v971 = vpop.f32.mrb[0].mxu0
        %v972 = vadd.f32 %v907, %v971
        %v973 = vpop.f32.mrb[0].mxu0
        %974 = vdwg.mxu0
        %975 = vmatprep.subr.bf16.mxu0 0
        %976 = vmatpush1.bf16.msra.mxu0 %v717
        %977 = vmatprep.subr.bf16.mxu0 0
        %978 = vmatpush1.bf16.msra.mxu0 0
        %979 = vmatprep.subr.bf16.mxu0 0
        %980 = vmatpush1.bf16.msra.mxu0 0
        %981 = vmatprep.subr.bf16.mxu0 0
        %982 = vmatpush1.bf16.msra.mxu0 0
        %983 = vmatprep.subr.bf16.mxu0 0
        %984 = vmatpush1.bf16.msra.mxu0 0
        %985 = vmatprep.subr.bf16.mxu0 0
        %986 = vmatpush1.bf16.msra.mxu0 0
        %987 = vmatprep.subr.bf16.mxu0 0
        %988 = vmatpush1.bf16.msra.mxu0 0
        %989 = vmatprep.subr.bf16.mxu0 0
        %990 = vmatpush1.bf16.msra.mxu0 0
        %991 = vmatprep.subr.bf16.mxu0 0
        %992 = vmatpush1.bf16.msra.mxu0 0
        %993 = vmatprep.subr.bf16.mxu0 0
        %994 = vmatpush1.bf16.msra.mxu0 0
        %995 = vmatprep.subr.bf16.mxu0 0
        %996 = vmatpush1.bf16.msra.mxu0 0
        %997 = vmatprep.subr.bf16.mxu0 0
        %998 = vmatpush1.bf16.msra.mxu0 0
        %999 = vmatprep.subr.bf16.mxu0 0
        %1000 = vmatpush1.bf16.msra.mxu0 0
        %1001 = vmatprep.subr.bf16.mxu0 0
        %1002 = vmatpush1.bf16.msra.mxu0 0
        %1003 = vmatprep.subr.bf16.mxu0 0
        %1004 = vmatpush1.bf16.msra.mxu0 0
        %1005 = vmatprep.subr.bf16.mxu0 0
        %1006 = vmatpush1.bf16.msra.mxu0 0
        %1007 = vmatprep.mubr.bf16.mxu0 0
        %1008 = vmatmul.mubr.bf16.gmra.mrb[0].mxu0 %v769
        %v1009 = vpop.f32.mrb[0].mxu0
        %v1010 = vadd.f32 %v945, %v1009
        %v1011 = vpop.f32.mrb[0].mxu0
        %v1012 = vpop.f32.mrb[0].mxu0
        %v1013 = vadd.f32 %v948, %v1012
        %v1014 = vpop.f32.mrb[0].mxu0
        %1015 = vmatprep.mubr.bf16.mxu0 0
        %1016 = vmatmul.mubr.bf16.gmra.mrb[0].mxu0 %v772
        %v1017 = vpop.f32.mrb[0].mxu0
        %v1018 = vadd.f32 %v953, %v1017
        %v1019 = vpop.f32.mrb[0].mxu0
        %v1020 = vpop.f32.mrb[0].mxu0
        %v1021 = vadd.f32 %v956, %v1020
        %v1022 = vpop.f32.mrb[0].mxu0
        %1023 = vmatprep.mubr.bf16.mxu0 0
        %1024 = vmatmul.mubr.bf16.gmra.mrb[0].mxu0 %v775
        %v1025 = vpop.f32.mrb[0].mxu0
        %v1026 = vadd.f32 %v961, %v1025
        %v1027 = vpop.f32.mrb[0].mxu0
        %v1028 = vpop.f32.mrb[0].mxu0
        %v1029 = vadd.f32 %v964, %v1028
        %v1030 = vpop.f32.mrb[0].mxu0
        %1031 = vmatprep.mubr.bf16.mxu0 0
        %1032 = vmatmul.mubr.bf16.gmra.mrb[0].mxu0 %v778
        %v1033 = vpop.f32.mrb[0].mxu0
        %v1034 = vadd.f32 %v969, %v1033
        %v1035 = vpop.f32.mrb[0].mxu0
        %v1036 = vpop.f32.mrb[0].mxu0
        %v1037 = vadd.f32 %v972, %v1036
        %v1038 = vpop.f32.mrb[0].mxu0
        %1039 = vdwg.mxu0
        %v1040 = vmax.f32 %v1010, 0.0
        %v1041 = vmax.f32 %v1013, 0.0
        %v1042 = vmax.f32 %v1018, 0.0
        %v1043 = vmax.f32 %v1021, 0.0
        %v1044 = vmax.f32 %v1026, 0.0
        %v1045 = vmax.f32 %v1029, 0.0
        %v1046 = vmax.f32 %v1034, 0.0
        %v1047 = vmax.f32 %v1037, 0.0
        %v1048 = vpack.c.bf16 %v1041, %v1040
        %v1049 = vpack.c.bf16 %v1043, %v1042
        %v1050 = vpack.c.bf16 %v1045, %v1044
        %v1051 = vpack.c.bf16 %v1047, %v1046
        %v1052 = vld [vmem:[%s3] sm:$0xf]
        %v1053 = vld [vmem:[%s3 + $0x4] sm:$0xf]
        %v1054 = vld [vmem:[%s3 + $0x8] sm:$0xf]
        %v1055 = vld [vmem:[%s3 + $0xc] sm:$0xf]
        %v1056 = vld [vmem:[%s3 + $0x10] sm:$0xf]
        %v1057 = vld [vmem:[%s3 + $0x14] sm:$0xf]
        %v1058 = vld [vmem:[%s3 + $0x18] sm:$0xf]
        %v1059 = vld [vmem:[%s3 + $0x1c] sm:$0xf]
        %v1060 = vld [vmem:[%s3 + $0x20] sm:$0xf]
        %v1061 = vld [vmem:[%s3 + $0x24] sm:$0xf]
        %v1062 = vld [vmem:[%s3 + $0x28] sm:$0xf]
        %v1063 = vld [vmem:[%s3 + $0x2c] sm:$0xf]
        %v1064 = vld [vmem:[%s3 + $0x30] sm:$0xf]
        %v1065 = vld [vmem:[%s3 + $0x34] sm:$0xf]
        %v1066 = vld [vmem:[%s3 + $0x38] sm:$0xf]
        %v1067 = vld [vmem:[%s3 + $0x3c] sm:$0xf]
        %v1068 = vld [vmem:[%s4] sm:$0x1]
        %v1070 = vlaneseq
        %v1071 = vshrl.u32 %v1070, 7
        %v1072 = vsub.s32 0, %v1071
        %v1073 = vrot.slane %v1068, %v1072
        %v1091 = vunpack.c.l.b16 %v1052
        %v1092 = vunpack.c.l.b16 %v1053
        %v1093 = vunpack.c.l.b16 %v1054
        %v1094 = vunpack.c.l.b16 %v1055
        %v1095 = vunpack.c.l.b16 %v1056
        %v1096 = vunpack.c.l.b16 %v1057
        %v1097 = vunpack.c.l.b16 %v1058
        %v1098 = vunpack.c.l.b16 %v1059
        %v1099 = vunpack.c.l.b16 %v1060
        %v1100 = vunpack.c.l.b16 %v1061
        %v1101 = vunpack.c.l.b16 %v1062
        %v1102 = vunpack.c.l.b16 %v1063
        %v1103 = vunpack.c.l.b16 %v1064
        %v1104 = vunpack.c.l.b16 %v1065
        %v1105 = vunpack.c.l.b16 %v1066
        %v1106 = vunpack.c.l.b16 %v1067
        %v1107 = vpack.c.b16 %v1092, %v1091
        %v1108 = vpack.c.b16 %v1094, %v1093
        %v1109 = vpack.c.b16 %v1096, %v1095
        %v1110 = vpack.c.b16 %v1098, %v1097
        %v1111 = vpack.c.b16 %v1100, %v1099
        %v1112 = vpack.c.b16 %v1102, %v1101
        %v1113 = vpack.c.b16 %v1104, %v1103
        %v1114 = vpack.c.b16 %v1106, %v1105
        %1123 = vmatprep.subr.bf16.mxu0 0
        %1124 = vmatpush1.bf16.msra.mxu0 %v1107
        %1125 = vmatprep.subr.bf16.mxu0 0
        %1126 = vmatpush1.bf16.msra.mxu0 %v1108
        %1127 = vmatprep.subr.bf16.mxu0 0
        %1128 = vmatpush1.bf16.msra.mxu0 %v1109
        %1129 = vmatprep.subr.bf16.mxu0 0
        %1130 = vmatpush1.bf16.msra.mxu0 %v1110
        %1131 = vmatprep.subr.bf16.mxu0 0
        %1132 = vmatpush1.bf16.msra.mxu0 %v1111
        %1133 = vmatprep.subr.bf16.mxu0 0
        %1134 = vmatpush1.bf16.msra.mxu0 %v1112
        %1135 = vmatprep.subr.bf16.mxu0 0
        %1136 = vmatpush1.bf16.msra.mxu0 %v1113
        %1137 = vmatprep.subr.bf16.mxu0 0
        %1138 = vmatpush1.bf16.msra.mxu0 %v1114
        %1139 = vmatprep.subr.bf16.mxu0 0
        %1140 = vmatpush1.bf16.msra.mxu0 0
        %1141 = vmatprep.subr.bf16.mxu0 0
        %1142 = vmatpush1.bf16.msra.mxu0 0
        %1143 = vmatprep.subr.bf16.mxu0 0
        %1144 = vmatpush1.bf16.msra.mxu0 0
        %1145 = vmatprep.subr.bf16.mxu0 0
        %1146 = vmatpush1.bf16.msra.mxu0 0
        %1147 = vmatprep.subr.bf16.mxu0 0
        %1148 = vmatpush1.bf16.msra.mxu0 0
        %1149 = vmatprep.subr.bf16.mxu0 0
        %1150 = vmatpush1.bf16.msra.mxu0 0
        %1151 = vmatprep.subr.bf16.mxu0 0
        %1152 = vmatpush1.bf16.msra.mxu0 0
        %1153 = vmatprep.subr.bf16.mxu0 0
        %1154 = vmatpush1.bf16.msra.mxu0 0
        %1155 = vmatprep.mubr.bf16.mxu0 0
        %1156 = vmatmul.mubr.bf16.gmra.mrb[0].mxu0 %v1048
        %v1157 = vpop.f32.mrb[0].mxu0
        %v1158 = vadd.f32 %v1073, %v1157
        %v1159 = vpop.f32.mrb[0].mxu0
        %v1160 = vpop.f32.mrb[0].mxu0
        %v1161 = vadd.f32 %v1073, %v1160
        %v1162 = vpop.f32.mrb[0].mxu0
        %1163 = vmatprep.mubr.bf16.mxu0 0
        %1164 = vmatmul.mubr.bf16.gmra.mrb[0].mxu0 %v1049
        %v1165 = vpop.f32.mrb[0].mxu0
        %v1166 = vadd.f32 %v1073, %v1165
        %v1167 = vpop.f32.mrb[0].mxu0
        %v1168 = vpop.f32.mrb[0].mxu0
        %v1169 = vadd.f32 %v1073, %v1168
        %v1170 = vpop.f32.mrb[0].mxu0
        %1171 = vmatprep.mubr.bf16.mxu0 0
        %1172 = vmatmul.mubr.bf16.gmra.mrb[0].mxu0 %v1050
        %v1173 = vpop.f32.mrb[0].mxu0
        %v1174 = vadd.f32 %v1073, %v1173
        %v1175 = vpop.f32.mrb[0].mxu0
        %v1176 = vpop.f32.mrb[0].mxu0
        %v1177 = vadd.f32 %v1073, %v1176
        %v1178 = vpop.f32.mrb[0].mxu0
        %1179 = vmatprep.mubr.bf16.mxu0 0
        %1180 = vmatmul.mubr.bf16.gmra.mrb[0].mxu0 %v1051
        %v1181 = vpop.f32.mrb[0].mxu0
        %v1182 = vadd.f32 %v1073, %v1181
        %v1183 = vpop.f32.mrb[0].mxu0
        %v1184 = vpop.f32.mrb[0].mxu0
        %v1185 = vadd.f32 %v1073, %v1184
        %v1186 = vpop.f32.mrb[0].mxu0
        %1187 = vdwg.mxu0
        %v1188 = vmax.f32 %v1158, 0.0
        %v1189 = vmax.f32 %v1161, 0.0
        %v1190 = vmax.f32 %v1166, 0.0
        %v1191 = vmax.f32 %v1169, 0.0
        %v1192 = vmax.f32 %v1174, 0.0
        %v1193 = vmax.f32 %v1177, 0.0
        %v1194 = vmax.f32 %v1182, 0.0
        %v1195 = vmax.f32 %v1185, 0.0
        %v1196 = vpack.c.bf16 %v1189, %v1188
        %v1197 = vpack.c.bf16 %v1191, %v1190
        %v1198 = vpack.c.bf16 %v1193, %v1192
        %v1199 = vpack.c.bf16 %v1195, %v1194
        %v1200 = vld [vmem:[%s5] sm:$0xf]
        %v1201 = vld [vmem:[%s5 + $0x4] sm:$0xf]
        %v1202 = vld [vmem:[%s5 + $0x8] sm:$0xf]
        %v1203 = vld [vmem:[%s5 + $0xc] sm:$0xf]
        %v1204 = vld [vmem:[%s5 + $0x10] sm:$0xf]
        %v1205 = vld [vmem:[%s5 + $0x14] sm:$0xf]
        %v1206 = vld [vmem:[%s5 + $0x18] sm:$0xf]
        %v1207 = vld [vmem:[%s5 + $0x1c] sm:$0xf]
        %v1208 = vld [vmem:[%s5 + $0x20] sm:$0xf]
        %v1209 = vld [vmem:[%s5 + $0x24] sm:$0xf]
        %v1210 = vld [vmem:[%s5 + $0x28] sm:$0xf]
        %v1211 = vld [vmem:[%s5 + $0x2c] sm:$0xf]
        %v1212 = vld [vmem:[%s5 + $0x30] sm:$0xf]
        %v1213 = vld [vmem:[%s5 + $0x34] sm:$0xf]
        %v1214 = vld [vmem:[%s5 + $0x38] sm:$0xf]
        %v1215 = vld [vmem:[%s5 + $0x3c] sm:$0xf]
        %v1216 = vld [vmem:[%s6] sm:$0x1]
        %v1218 = vlaneseq
        %v1219 = vshrl.u32 %v1218, 7
        %v1220 = vsub.s32 0, %v1219
        %v1221 = vrot.slane %v1216, %v1220
        %v1239 = vunpack.c.l.b16 %v1200
        %v1240 = vunpack.c.l.b16 %v1201
        %v1241 = vunpack.c.l.b16 %v1202
        %v1242 = vunpack.c.l.b16 %v1203
        %v1243 = vunpack.c.l.b16 %v1204
        %v1244 = vunpack.c.l.b16 %v1205
        %v1245 = vunpack.c.l.b16 %v1206
        %v1246 = vunpack.c.l.b16 %v1207
        %v1247 = vunpack.c.l.b16 %v1208
        %v1248 = vunpack.c.l.b16 %v1209
        %v1249 = vunpack.c.l.b16 %v1210
        %v1250 = vunpack.c.l.b16 %v1211
        %v1251 = vunpack.c.l.b16 %v1212
        %v1252 = vunpack.c.l.b16 %v1213
        %v1253 = vunpack.c.l.b16 %v1214
        %v1254 = vunpack.c.l.b16 %v1215
        %v1255 = vpack.c.b16 %v1240, %v1239
        %v1256 = vpack.c.b16 %v1242, %v1241
        %v1257 = vpack.c.b16 %v1244, %v1243
        %v1258 = vpack.c.b16 %v1246, %v1245
        %v1259 = vpack.c.b16 %v1248, %v1247
        %v1260 = vpack.c.b16 %v1250, %v1249
        %v1261 = vpack.c.b16 %v1252, %v1251
        %v1262 = vpack.c.b16 %v1254, %v1253
        %1271 = vmatprep.subr.bf16.mxu0 0
        %1272 = vmatpush1.bf16.msra.mxu0 %v1255
        %1273 = vmatprep.subr.bf16.mxu0 0
        %1274 = vmatpush1.bf16.msra.mxu0 %v1256
        %1275 = vmatprep.subr.bf16.mxu0 0
        %1276 = vmatpush1.bf16.msra.mxu0 %v1257
        %1277 = vmatprep.subr.bf16.mxu0 0
        %1278 = vmatpush1.bf16.msra.mxu0 %v1258
        %1279 = vmatprep.subr.bf16.mxu0 0
        %1280 = vmatpush1.bf16.msra.mxu0 %v1259
        %1281 = vmatprep.subr.bf16.mxu0 0
        %1282 = vmatpush1.bf16.msra.mxu0 %v1260
        %1283 = vmatprep.subr.bf16.mxu0 0
        %1284 = vmatpush1.bf16.msra.mxu0 %v1261
        %1285 = vmatprep.subr.bf16.mxu0 0
        %1286 = vmatpush1.bf16.msra.mxu0 %v1262
        %1287 = vmatprep.subr.bf16.mxu0 0
        %1288 = vmatpush1.bf16.msra.mxu0 0
        %1289 = vmatprep.subr.bf16.mxu0 0
        %1290 = vmatpush1.bf16.msra.mxu0 0
        %1291 = vmatprep.subr.bf16.mxu0 0
        %1292 = vmatpush1.bf16.msra.mxu0 0
        %1293 = vmatprep.subr.bf16.mxu0 0
        %1294 = vmatpush1.bf16.msra.mxu0 0
        %1295 = vmatprep.subr.bf16.mxu0 0
        %1296 = vmatpush1.bf16.msra.mxu0 0
        %1297 = vmatprep.subr.bf16.mxu0 0
        %1298 = vmatpush1.bf16.msra.mxu0 0
        %1299 = vmatprep.subr.bf16.mxu0 0
        %1300 = vmatpush1.bf16.msra.mxu0 0
        %1301 = vmatprep.subr.bf16.mxu0 0
        %1302 = vmatpush1.bf16.msra.mxu0 0
        %1303 = vmatprep.mubr.bf16.mxu0 0
        %1304 = vmatmul.mubr.bf16.gmra.mrb[0].mxu0 %v1196
        %v1305 = vpop.f32.mrb[0].mxu0
        %v1306 = vadd.f32 %v1221, %v1305
        %v1307 = vpop.f32.mrb[0].mxu0
        %v1308 = vpop.f32.mrb[0].mxu0
        %v1309 = vadd.f32 %v1221, %v1308
        %v1310 = vpop.f32.mrb[0].mxu0
        %1311 = vmatprep.mubr.bf16.mxu0 0
        %1312 = vmatmul.mubr.bf16.gmra.mrb[0].mxu0 %v1197
        %v1313 = vpop.f32.mrb[0].mxu0
        %v1314 = vadd.f32 %v1221, %v1313
        %v1315 = vpop.f32.mrb[0].mxu0
        %v1316 = vpop.f32.mrb[0].mxu0
        %v1317 = vadd.f32 %v1221, %v1316
        %v1318 = vpop.f32.mrb[0].mxu0
        %1319 = vmatprep.mubr.bf16.mxu0 0
        %1320 = vmatmul.mubr.bf16.gmra.mrb[0].mxu0 %v1198
        %v1321 = vpop.f32.mrb[0].mxu0
        %v1322 = vadd.f32 %v1221, %v1321
        %v1323 = vpop.f32.mrb[0].mxu0
        %v1324 = vpop.f32.mrb[0].mxu0
        %v1325 = vadd.f32 %v1221, %v1324
        %v1326 = vpop.f32.mrb[0].mxu0
        %1327 = vmatprep.mubr.bf16.mxu0 0
        %1328 = vmatmul.mubr.bf16.gmra.mrb[0].mxu0 %v1199
        %v1329 = vpop.f32.mrb[0].mxu0
        %v1330 = vadd.f32 %v1221, %v1329
        %v1331 = vpop.f32.mrb[0].mxu0
        %v1332 = vpop.f32.mrb[0].mxu0
        %v1333 = vadd.f32 %v1221, %v1332
        %v1334 = vpop.f32.mrb[0].mxu0
        %1335 = vdwg.mxu0
        %1336 = vst [vmem:[%s274] sm:$0xff] %v1306
        %1337 = vst [vmem:[%s274 + $0x8] sm:$0xff] %v1309
        %1338 = vst [vmem:[%s274 + $0x10] sm:$0xff] %v1314
        %1339 = vst [vmem:[%s274 + $0x18] sm:$0xff] %v1317
        %1340 = vst [vmem:[%s274 + $0x20] sm:$0xff] %v1322
        %1341 = vst [vmem:[%s274 + $0x28] sm:$0xff] %v1325
        %1342 = vst [vmem:[%s274 + $0x30] sm:$0xff] %v1330
        %1343 = vst [vmem:[%s274 + $0x38] sm:$0xff] %v1333
        %s1344 = sand.u32 %s181, 1
        %s1345 = scalar_lea.sflag [#allocation3], %s1344
        %s1346 = sand.u32 %s181, 1
        %s1347 = smul.addr %s1346, 64
        %s1348 = scalar_lea.vmem [#allocation2], %s1347
        // Predicated region
        $region49: #{tpu_custom_call.1} parent=47 // pred_check
          %p1349 = pneg %p191
        $region50: #{tpu_custom_call.1} parent=47 // pred_check_branch
          %1351 = sbr.rel (%p1349) target = $region52
        $region51: #{tpu_custom_call.1} parent=47 // pred_region
          %s1352 = smul.u32 8, %s21
          %s1354 = ssub.s32 1024, 1024
          %1355 = vsyncadd %s1345, %s1354
          %s1356 = smul.addr %s1352, 128
          %s1357 = scalar_lea.hbm %s7, %s1356
          %s1358 = sshll.u32 %s1348, 4
          %s1359 = int_to_ptr.vmem [resolvable:$true] %s1358
          %1364 = dma.vmem_to_hbm [thread:$0]  %s1359, 1024, %s1357, %s1345, 128, 128, 8
        $region52: #{tpu_custom_call.1} parent=47 // pred_fallthru
          _
      $region48: #{tpu_custom_call.1} parent=5 // pred_fallthru
        _
      %p1365 = scmp.le.s32.totalorder 2, %s16
      // Predicated region
      $region53: #{tpu_custom_call.1} parent=5 // pred_check
        %p1366 = pneg %p1365
      $region54: #{tpu_custom_call.1} parent=5 // pred_check_branch
        %1368 = sbr.rel (%p1366) target = $region56
      $region55: #{tpu_custom_call.1} parent=5 // pred_region
        %s1369 = ssub.s32 %s16, 2
        // Predicated region
        $region57: #{tpu_custom_call.1} parent=55 // pred_check
          %p1370 = pneg %p197
        $region58: #{tpu_custom_call.1} parent=55 // pred_check_branch
          %1372 = sbr.rel (%p1370) target = $region60
        $region59: #{tpu_custom_call.1} parent=55 // pred_region
          %s1373 = sand.u32 %s182, 1
          %s1374 = scalar_lea.sflag [#allocation3], %s1373
          %s1375 = sand.u32 %s182, 1
          %s1376 = smul.addr %s1375, 64
          %s1377 = scalar_lea.vmem [#allocation2], %s1376
          %1378 = dma.done %s1374, 1024
        $region60: #{tpu_custom_call.1} parent=55 // pred_fallthru
          _
      $region56: #{tpu_custom_call.1} parent=5 // pred_fallthru
        _
    $region6: #{tpu_custom_call.1} parent=1 // loop_footer
      %s20 = sadd.s32 1, %s16
    $region7: #{tpu_custom_call.1} parent=1 // loop_footer_branch
      %15 = sbr.rel target = $region3
    $region8: #{tpu_custom_call.1} parent=1 // loop_exit
      _
    %1379 = vsyncpa [#allocation3], 1
    %s1380 = scalar_lea.sflag [#allocation3], 1
    %1381 = vsyncpa %s1380, 1

</llo_original>
